<compile_context>
chip_gen: v7x
topology: tpu7x:2x2x1
jax: 0.10.0
libtpu: 0.0.40
codegen_flags: <defaults>
</compile_context>

<pallas_src>
import jax
import jax.numpy as jnp
from jax.experimental import pallas as pl
from jax.experimental.pallas import tpu as pltpu


def _round_up(x: int, m: int) -> int:
    return -(-x // m) * m


def _resident_gather_kernel(flat_ref, field_ref, out_ref):
    """Gather a group of probes from the VMEM-resident transposed field.

    flat_ref : SMEM (P_pad,) int32 -- flattened probe indices (scalar prefetch)
    field_ref: VMEM (HW, B)        -- transposed field, resident across the grid
    out_ref  : VMEM (G, B)         -- this grid step's slab of the (P_pad, B) output
    """
    g = pl.program_id(0)
    group = out_ref.shape[0]

    @pl.loop(0, group)
    def _(i):
        f = flat_ref[g * group + i]                           # scalar SMEM read
        # One dynamic-sublane row load + one dynamic-sublane row store per probe.
        out_ref[pl.ds(i, 1), :] = field_ref[pl.ds(f, 1), :]


def _window_gather_kernel(flat_ref, window_ref, out_ref):
    """Fallback: gather one probe per grid step from a small field window.

    flat_ref  : SMEM (P,) int32 -- flattened probe indices, sorted by window
    window_ref: VMEM (BROWS, B) -- row window of the transposed field holding probe i
    out_ref   : VMEM (OG, B)    -- output block, resident across the steps that hit it
    """
    i = pl.program_id(0)
    brows = window_ref.shape[0]
    og = out_ref.shape[0]
    f = flat_ref[i]
    out_ref[pl.ds(i % og, 1), :] = window_ref[pl.ds(f % brows, 1), :]


def wave_intensity_probe(field, probe_x, probe_y, *,
                         force_window_path=False,
                         vmem_budget_bytes=20 * 1024 * 1024):
    """field: (B, H, W) float array; probe_x/probe_y: (P,) integer arrays.

    Returns field[:, probe_x, probe_y] of shape (B, P).
    """
    B, H, W = field.shape
    P = int(probe_x.shape[0])
    dtype = field.dtype
    HW = H * W
    assert HW < 2 ** 31, "flat probe index (x*W + y) would overflow int32"

    if P == 0:
        return jnp.zeros((B, 0), dtype)

    # Fuse (x, y) into a flat index; wrap negatives like PyTorch indexing.
    px = jnp.asarray(probe_x, jnp.int32).reshape(P) % H
    py = jnp.asarray(probe_y, jnp.int32).reshape(P) % W
    flat = px * W + py                                          # (P,) int32

    # Transposed field: batch on lanes, flattened position on sublanes.  Probe
    # reads and output writes then become plain dynamic-sublane row moves.
    field_t = field.reshape(B, HW).T                            # (HW, B)

    itemsize = jnp.dtype(dtype).itemsize
    vmem_tile_bytes = _round_up(HW, 8) * _round_up(B, 128) * itemsize
    resident = (not force_window_path) and (2 * vmem_tile_bytes <= vmem_budget_bytes)

    cparams = pltpu.CompilerParams(
        dimension_semantics=("arbitrary",),
        vmem_limit_bytes=32 * 1024 * 1024,   # raise v5e's 16 MiB scoped default
    )

    if resident:
        # ---- fast path: whole transposed field resident in VMEM --------------
        if P <= 1024:
            group, p_pad = P, P                       # single grid step
        else:
            group = 1024                              # probes per grid step
            p_pad = _round_up(P, group)
        n_groups = p_pad // group
        flat_pad = jnp.pad(flat, (0, p_pad - P)) if p_pad > P else flat

        out_pb = pl.pallas_call(
            _resident_gather_kernel,
            out_shape=jax.ShapeDtypeStruct((p_pad, B), dtype),
            grid_spec=pltpu.PrefetchScalarGridSpec(
                num_scalar_prefetch=1,
                grid=(n_groups,),
                in_specs=[pl.BlockSpec((HW, B), lambda g, flat_r: (0, 0))],
                out_specs=pl.BlockSpec((group, B), lambda g, flat_r: (g, 0)),
            ),
            compiler_params=cparams,
        )(flat_pad, field_t)
        return out_pb[:P, :].T                        # (B, P); tiny epilogue transpose

    # ---- fallback: field too large for VMEM; small window DMA per probe ------
    brows = HW if HW < 512 else 512                   # window rows (8 | brows or == HW)
    og = P if P < 4096 else 4096                      # output block rows

    # Sort probes by window so consecutive grid steps that hit the same window
    # skip the re-DMA entirely; un-permute the output rows afterwards.
    order = jnp.argsort(flat // brows)
    inv = jnp.argsort(order)
    flat_sorted = flat[order]

    out_pb = pl.pallas_call(
        _window_gather_kernel,
        out_shape=jax.ShapeDtypeStruct((P, B), dtype),
        grid_spec=pltpu.PrefetchScalarGridSpec(
            num_scalar_prefetch=1,
            grid=(P,),
            in_specs=[pl.BlockSpec((brows, B),
                                   lambda i, flat_r: (flat_r[i] // brows, 0))],
            out_specs=pl.BlockSpec((og, B), lambda i, flat_r: (i // og, 0)),
        ),
        compiler_params=cparams,
    )(flat_sorted, field_t)
    return out_pb[inv, :].T                           # un-permute rows -> (B, P)


if __name__ == "__main__":
    key = jax.random.PRNGKey(0)
    B, H, W = 2, 16, 16
    P = 5  # number of probe points

    k_field, k_x, k_y = jax.random.split(key, 3)
    field = jax.random.normal(k_field, (B, H, W), dtype=jnp.float32)

    # Deterministic probe locations (int64 buffers in PyTorch; int32 suffices on TPU).
    probe_x = jax.random.randint(k_x, (P,), 0, H, dtype=jnp.int32)
    probe_y = jax.random.randint(k_y, (P,), 0, W, dtype=jnp.int32)
    probe_x = probe_x.at[0].set(-1)   # exercise negative-index wrap (PyTorch-compatible)

    # Reference: exact advanced-indexing semantics of x[:, self.x, self.y].
    ref = field[:, probe_x, probe_y]

    # Fast (VMEM-resident field) path.
    out = jax.block_until_ready(wave_intensity_probe(field, probe_x, probe_y))
    assert out.shape == (B, P), out.shape
    assert jnp.allclose(out, ref, atol=1e-6, rtol=1e-6), (out, ref)

    # Fallback (per-probe window DMA) path, forced for coverage.
    out_w = jax.block_until_ready(
        wave_intensity_probe(field, probe_x, probe_y, force_window_path=True))
    assert out_w.shape == (B, P), out_w.shape
    assert jnp.allclose(out_w, ref, atol=1e-6, rtol=1e-6), (out_w, ref)

    print("KERNEL_OK")
</pallas_src>

<mosaic_0001>
module attributes {stable_mosaic.version = 11 : i64} {
  func.func @_resident_gather_kernel(%arg0: i32, %arg1: memref<5xi32, #tpu.memory_space<smem>>, %arg2: memref<256x2xf32, #tpu.memory_space<vmem>>, %arg3: memref<5x2xf32, #tpu.memory_space<vmem>>) attributes {dimension_semantics = [#tpu.dimension_semantics<arbitrary>], iteration_bounds = array<i64: 1>, scalar_prefetch = 1 : i64, scratch_operands = 0 : i64, tpu.core_type = #tpu.core_type<tc>, window_params = [{pipeline_mode = #tpu.pipeline_mode<synchronous>, transform_indices = @transform_0, window_bounds = array<i64: 256, 2>}, {transform_indices = @transform_1, window_bounds = array<i64: 5, 2>}]} {
    %c0_i32 = arith.constant 0 : i32
    %c5_i32 = arith.constant 5 : i32
    %0 = arith.addi %c0_i32, %c5_i32 : i32
    %c1_i32 = arith.constant 1 : i32
    scf.for %arg4 = %c0_i32 to %0 step %c1_i32  : i32 {
      %c1_i32_1 = arith.constant 1 : i32
      %1 = arith.muli %arg4, %c1_i32_1 : i32
      %c0_i32_2 = arith.constant 0 : i32
      %2 = arith.addi %c0_i32_2, %1 : i32
      %c5_i32_3 = arith.constant 5 : i32
      %3 = arith.muli %arg0, %c5_i32_3 : i32
      %4 = arith.addi %3, %2 : i32
      %5 = arith.index_cast %4 : i32 to index
      %6 = memref.load %arg1[%5] : memref<5xi32, #tpu.memory_space<smem>>
      %7 = arith.index_cast %6 : i32 to index
      %c0 = arith.constant 0 : index
      %8 = vector.load %arg2[%7, %c0] : memref<256x2xf32, #tpu.memory_space<vmem>>, vector<1x2xf32>
      %9 = arith.index_cast %2 : i32 to index
      %c0_4 = arith.constant 0 : index
      %10 = vector.load %arg3[%9, %c0_4] : memref<5x2xf32, #tpu.memory_space<vmem>>, vector<1x2xf32>
      tpu.vector_store %arg3[%9, %c0_4], %8 {strides = array<i32>} : memref<5x2xf32, #tpu.memory_space<vmem>>, vector<1x2xf32>,
    }
    %c5_i32_0 = arith.constant 5 : i32
    return
  }
  func.func @transform_0(%arg0: i32, %arg1: memref<5xi32, #tpu.memory_space<smem>>) -> (i32, i32) {
    %c0_i32 = arith.constant 0 : i32
    %c0_i32_0 = arith.constant 0 : i32
    %c0_i32_1 = arith.constant 0 : i32
    return %c0_i32, %c0_i32_0 : i32, i32
  }
  func.func @transform_1(%arg0: i32, %arg1: memref<5xi32, #tpu.memory_space<smem>>) -> (i32, i32) {
    %c0_i32 = arith.constant 0 : i32
    %c0_i32_0 = arith.constant 0 : i32
    return %arg0, %c0_i32 : i32, i32
  }
}

</mosaic_0001>

<llo_original>
// kernel: tpu_custom_call.1
$region0: #{tpu_custom_call.1}
  #allocation0 [shape = 'u32[]', space=smem, size = 0x4, offset = 0x4, fixed_abs, tag = 'smem constant byte address 0x4 - core index']
  #allocation1 [shape = 'u32[144,128]{1,0:T(1,128)}', space=vmem, size = 0x12000, scoped, tag = 'internal scratch']
  #allocation2 [shape = 's32[1]{0}', space=sflag, size = 0x4, scoped, tag = 'scoped memory for tpu_custom_call.1']
  #allocation3 [shape = 'u8[512]{0}', space=smem, size = 0x200, scoped, tag = 'prefetched SMEM operand 0']
  %s0 = inlined_call_operand.vmem [shape: s32[5], index: 0, kind: input, shape index: {}]
  %s1 = inlined_call_operand.vmem [shape: f32[256,2], index: 1, kind: input, shape index: {}]
  %s2 = inlined_call_operand.vmem [shape: f32[5,2], index: 2, kind: output, shape index: {}]
  %s3 = sld [smem:[#allocation0]]
  $region21: #{tpu_custom_call.1} parent=0
    _
  %s5 = ssub.s32 1, %s3
  %s6 = scalar_select 0, %s5, %s3
  %s7 = sshll.u32 %s0, 4
  %s8 = int_to_ptr.vmem [resolvable:$true] %s7
  %10 = dma.vmem_to_smem %s8, 16, [#allocation3], [#allocation2]
  %11 = dma.done [#allocation2], 16
  %12 = sfence
  // Predicated region
  $region2: #{tpu_custom_call.1} parent=0 // pred_check
    _
  $region3: #{tpu_custom_call.1} parent=0 // pred_check_branch
    %14 = sbr.rel (0) target = $region5
  $region4: #{tpu_custom_call.1} parent=0 // pred_region
    _
  $region5: #{tpu_custom_call.1} parent=0 // pred_fallthru
    _
  loop: start=0, step=1, limit=5
  $region6: #{tpu_custom_call.1} parent=0 // loop_pre_header
    _
  $region7: #{tpu_custom_call.1} parent=0 // loop_header
    %s16 = sphi 0, %s20
    %p17 = scmp.ge.s32.totalorder %s16, 5
  $region8: #{tpu_custom_call.1} parent=0 // loop_header_branch
    %19 = sbr.rel (%p17) target = $region12
  $region9: #{tpu_custom_call.1} parent=0 // loop_body
    %s21 = smul.u32 0, 5
    %s22 = sadd.s32 %s21, %s16
    %s23 = sld [smem:[#allocation3 + %s22]]
    %s24 = scalar_lea.vmem %s1, %s23
    %v25 = vld [vmem:[%s24] sm:$0x1]
    %s26 = scalar_lea.vmem %s2, %s16
    %vm27 = vcmask 8192
    %28 = vst.msk [vmem:[%s26] sm:$0x1] %vm27, %v25
  $region10: #{tpu_custom_call.1} parent=0 // loop_footer
    %s20 = sadd.s32 1, %s16
  $region11: #{tpu_custom_call.1} parent=0 // loop_footer_branch
    %15 = sbr.rel target = $region7
  $region12: #{tpu_custom_call.1} parent=0 // loop_exit
    _
  // Predicated region
  $region13: #{tpu_custom_call.1} parent=0 // pred_check
    _
  $region14: #{tpu_custom_call.1} parent=0 // pred_check_branch
    %30 = sbr.rel (0) target = $region16
  $region15: #{tpu_custom_call.1} parent=0 // pred_region
    _
  $region16: #{tpu_custom_call.1} parent=0 // pred_fallthru
    _
  // Predicated region
  $region17: #{tpu_custom_call.1} parent=0 // pred_check
    _
  $region18: #{tpu_custom_call.1} parent=0 // pred_check_branch
    %32 = sbr.rel (0) target = $region20
  $region19: #{tpu_custom_call.1} parent=0 // pred_region
    _
  $region20: #{tpu_custom_call.1} parent=0 // pred_fallthru
    _

</llo_original>
